<compile_context>
chip_gen: v5e
topology: v5e:2x2
jax: 0.10.0
libtpu: 0.0.40
codegen_flags: <defaults>
</compile_context>

<pallas_src>
import functools

import numpy as np
import jax
import jax.numpy as jnp
from jax.experimental import pallas as pl
from jax.experimental.pallas import tpu as pltpu

BIG_NEG = 1.0e12          # torch code uses -1e12 masks (reference only)
TEMPERATURE = 0.1
# torch.cosine_similarity clamps ||a||*||b|| at 1e-8; we clamp each squared norm
# at 1e-8 (norm >= 1e-4) which is identical for any non-degenerate embedding and
# keeps zero-padded rows finite.
NORM_SQ_EPS = 1e-8
_B_TILE_MAX = 256         # rows per grid step; keeps (tile, V) f32 slabs well
                          # inside v7x's 64 MiB VMEM for realistic V


def _round_up(x, m):
    return (x + m - 1) // m * m


# ----------------------------- Pallas kernel ------------------------------- #
def _contrastive_loss_kernel(q_ref, ot_ref, tgt_ref, loss_ref, *,
                             inv_temp, n_rows, n_cols):
    b_tile, _ = q_ref.shape
    v_pad = ot_ref.shape[1]

    q = q_ref[...].astype(jnp.float32)            # (b_tile, D_pad)
    ot = ot_ref[...].astype(jnp.float32)          # (D_pad,  V_pad)  == values^T

    # Pre-normalize along the hidden dim -> cosine similarity is a single plain
    # MXU matmul, no denominator outer product, no (B,M) divide.  rsqrt -> EUP.
    q_hat = q * jax.lax.rsqrt(
        jnp.maximum(jnp.sum(q * q, axis=-1, keepdims=True), NORM_SQ_EPS))
    ot_hat = ot * jax.lax.rsqrt(
        jnp.maximum(jnp.sum(ot * ot, axis=0, keepdims=True), NORM_SQ_EPS))

    # (b_tile, D_pad) @ (D_pad, V_pad) -> natural MXU layout (K on lane/sublane).
    sim = jnp.dot(q_hat, ot_hat, preferred_element_type=jnp.float32)

    # cosine/temperature <= 10, so exp() cannot overflow; no row-max needed.
    e = jnp.exp(sim * inv_temp)                   # (b_tile, V_pad)
    if n_cols != v_pad:                           # static: zero out padded value cols
        col_ids = jax.lax.broadcasted_iota(jnp.int32, (1, v_pad), 1)
        e = e * (col_ids < n_cols).astype(jnp.float32)

    tgt = tgt_ref[...]                            # (b_tile, V_pad), zero on padding
    pos = jnp.sum(e * tgt, axis=-1, keepdims=True)    # (b_tile, 1)
    total = jnp.sum(e, axis=-1, keepdims=True)        # pos + neg, no second pass
    loss = jnp.log(total) - jnp.log(pos)              # == -log(pos / (pos + neg))

    if n_rows % b_tile != 0:                      # static: mask padded query rows
        row_ids = (pl.program_id(0) * b_tile
                   + jax.lax.broadcasted_iota(jnp.int32, (b_tile, 1), 0))
        loss = jnp.where(row_ids < n_rows, loss, 0.0)

    # Lane-dense unmasked store (avoids per-row vst.msk of a (B,1) column).
    loss_ref[...] = jnp.broadcast_to(loss, (b_tile, 128))


def contrastive_loss_pallas(query, neg_values, sup_target, temperature=TEMPERATURE):
    """query: (B, D); neg_values: (V, D); sup_target: (B, V). Returns scalar mean loss."""
    B, D = query.shape
    V = neg_values.shape[0]

    # --- pad to TPU-friendly shapes (real workloads are usually aligned) -----
    D_pad = _round_up(D, 128)
    V_pad = _round_up(V, 128)
    B_pad = _round_up(B, 8)
    if B_pad <= _B_TILE_MAX:
        b_tile = B_pad
    else:
        b_tile = _B_TILE_MAX
        B_pad = _round_up(B, b_tile)
    num_tiles = B_pad // b_tile

    q_p = jnp.zeros((B_pad, D_pad), query.dtype).at[:B, :D].set(query)
    # rhs pre-transposed to (D, V): contraction dim on the sublane axis of the
    # rhs -> no in-kernel relayout/transpose.
    ot_p = jnp.zeros((D_pad, V_pad), neg_values.dtype).at[:D, :V].set(neg_values.T)
    tgt_p = jnp.zeros((B_pad, V_pad), jnp.float32).at[:B, :V].set(
        sup_target.astype(jnp.float32))

    kernel = functools.partial(_contrastive_loss_kernel,
                               inv_temp=float(1.0 / temperature),
                               n_rows=B, n_cols=V)

    loss_rows = pl.pallas_call(
        kernel,
        out_shape=jax.ShapeDtypeStruct((B_pad, 128), jnp.float32),
        grid_spec=pltpu.PrefetchScalarGridSpec(
            num_scalar_prefetch=0,
            grid=(num_tiles,),
            in_specs=[
                pl.BlockSpec((b_tile, D_pad), lambda i: (i, 0)),   # queries
                pl.BlockSpec((D_pad, V_pad), lambda i: (0, 0)),    # values^T (resident)
                pl.BlockSpec((b_tile, V_pad), lambda i: (i, 0)),   # supervised target
            ],
            out_specs=pl.BlockSpec((b_tile, 128), lambda i: (i, 0)),
        ),
        compiler_params=pltpu.CompilerParams(
            # B axis is embarrassingly parallel -> both TensorCores on v7x.
            dimension_semantics=("parallel",),
            # 48 MiB: well above the 16/32 MiB scoped defaults, with headroom
            # under v7x's 64 MiB physical VMEM per TensorCore.
            vmem_limit_bytes=48 * 1024 * 1024,
        ),
    )(q_p, ot_p, tgt_p)

    # reduction='mean' over the B real rows (tiny trailing XLA reduce).
    return jnp.sum(loss_rows[:B, 0]) / B


# ------------------------------ JAX glue ----------------------------------- #
def contrastive_loss_forward(query_dict, output_list, value_dict, scores_list,
                             truth_list, temperature=TEMPERATURE):
    queries = query_dict['single']
    neg_values = value_dict['neg']
    # Gated on the fixed config above: the 'hard' negative queries, the positive
    # value embeddings (output_list) and the softmax positive-weights only touch
    # the Q x Q block, which the -1e12 mask sends to exp()==0.0 exactly in f32,
    # so they cannot affect the loss and are skipped here.
    del output_list, scores_list

    q_nums = [int(q.shape[0]) for q in queries]
    v_nums = [int(v.shape[0]) for v in neg_values]
    B, V = sum(q_nums), sum(v_nums)

    # target_for_supervised_value: block-diagonal truth matrix (B, V)
    sup_target = np.zeros((B, V), np.float32)
    qs = vs = 0
    for i in range(len(q_nums)):
        sup_target[qs:qs + q_nums[i], vs:vs + v_nums[i]] = \
            np.asarray(truth_list[i], np.float32).reshape(q_nums[i], v_nums[i])
        qs += q_nums[i]
        vs += v_nums[i]

    Q = jnp.concatenate(list(queries), axis=0)       # (B, D)
    NV = jnp.concatenate(list(neg_values), axis=0)   # (V, D)
    return contrastive_loss_pallas(Q, NV, jnp.asarray(sup_target), temperature)


# --------------------- dense numpy reference (original math) --------------- #
def _reference_loss(query_dict, output_list, value_dict, scores_list, truth_list,
                    temperature=TEMPERATURE):
    queries = [np.asarray(q, np.float32) for q in query_dict['single']]
    neg_vals = [np.asarray(v, np.float32) for v in value_dict['neg']]
    outs = [np.asarray(o, np.float32) for o in output_list]
    q_nums = [q.shape[0] for q in queries]
    v_nums = [v.shape[0] for v in neg_vals]
    B, V = sum(q_nums), sum(v_nums)
    Q = np.concatenate(queries, 0)
    O = np.concatenate(outs + neg_vals, 0)                       # (B+V, D)

    sup = np.zeros((B, V), np.float32)
    qs = vs = 0
    for i in range(len(q_nums)):
        sup[qs:qs + q_nums[i], vs:vs + v_nums[i]] = \
            np.asarray(truth_list[i], np.float32).reshape(q_nums[i], v_nums[i])
        qs += q_nums[i]
        vs += v_nums[i]
    one_hot = np.concatenate([np.eye(B, dtype=np.float32), sup], 1)
    score_mask = np.concatenate(
        [-BIG_NEG * np.ones((B, B), np.float32), np.zeros((B, V), np.float32)], 1)

    # positive weights: source='pos', type='sum', normalize='soft', range='in_case'
    w_list = [np.sum(np.asarray(s['pos'], np.float32), -1) for s in scores_list]
    w_list = [np.exp(w - w.max()) / np.sum(np.exp(w - w.max())) for w in w_list]
    w_vec = np.concatenate(w_list, 0)
    wmask = np.zeros((B, B), np.float32)
    s = 0
    for n in q_nums:
        wmask[s:s + n, s:s + n] = 1.0
        s += n
    weights = w_vec[None, :] * wmask + (1.0 - wmask)
    weights = np.concatenate([weights, np.ones((B, V), np.float32)], 1)

    qn = np.linalg.norm(Q, axis=1, keepdims=True)
    on = np.linalg.norm(O, axis=1, keepdims=True)
    sim = (Q @ O.T) / np.maximum(qn * on.T, 1e-8)
    logits = sim / temperature + score_mask
    e = np.exp(logits) * weights
    pos = np.sum(e * one_hot, 1)
    neg = np.sum(e * (1.0 - one_hot), 1)
    return float(np.mean(-np.log(pos / (pos + neg))))


# --------------------------------- main ------------------------------------ #
if __name__ == "__main__":
    key = jax.random.PRNGKey(0)
    n_cases = 2
    q_nums = [4, 4]       # queries per case
    v_nums = [3, 3]       # negative values per case
    D = 32                # hidden size
    S = 8                 # attention-score length

    k_q, k_nq, k_out, k_nv, k_sc = jax.random.split(key, 5)
    query_single = [jax.random.normal(jax.random.fold_in(k_q, i), (q_nums[i], D), jnp.float32)
                    for i in range(n_cases)]
    neg_query = [jax.random.normal(jax.random.fold_in(k_nq, i), (2 * q_nums[i], D), jnp.float32)
                 for i in range(n_cases)]
    output_list = [jax.random.normal(jax.random.fold_in(k_out, i), (q_nums[i], D), jnp.float32)
                   for i in range(n_cases)]
    neg_value = [jax.random.normal(jax.random.fold_in(k_nv, i), (v_nums[i], D), jnp.float32)
                 for i in range(n_cases)]
    scores_list = [{'pos': jax.random.uniform(jax.random.fold_in(k_sc, i), (q_nums[i], S), jnp.float32)}
                   for i in range(n_cases)]
    # supervised truth per case: q_num * v_num entries, each query row has >=1 positive
    truth_list = [
        [1, 0, 0, 0, 1, 0, 0, 0, 1, 1, 1, 0],
        [0, 1, 0, 1, 0, 0, 0, 0, 1, 0, 1, 1],
    ]

    query_dict = {'single': query_single, 'hard': neg_query}
    value_dict = {'neg': neg_value}

    loss = contrastive_loss_forward(query_dict, output_list, value_dict,
                                    scores_list, truth_list)
    loss = jax.block_until_ready(loss)
    loss_val = float(loss)
    assert np.isfinite(loss_val)

    # Check the simplified kernel against the full original formulation.
    ref = _reference_loss(query_dict, output_list, value_dict, scores_list, truth_list)
    np.testing.assert_allclose(loss_val, ref, rtol=5e-2, atol=5e-2)

    # TODO(synk): self.loss_fct (nn.CrossEntropyLoss) is constructed but never used in forward; omitted.
    print("KERNEL_OK")
</pallas_src>

<mosaic_0001>
module attributes {stable_mosaic.version = 11 : i64} {
  func.func @_contrastive_loss_kernel(%arg0: i32, %arg1: memref<8x128xf32, #tpu.memory_space<vmem>>, %arg2: memref<128x128xf32, #tpu.memory_space<vmem>>, %arg3: memref<8x128xf32, #tpu.memory_space<vmem>>, %arg4: memref<8x128xf32, #tpu.memory_space<vmem>>) attributes {dimension_semantics = [#tpu.dimension_semantics<parallel>], iteration_bounds = array<i64: 1>, scalar_prefetch = 0 : i64, scratch_operands = 0 : i64, tpu.core_type = #tpu.core_type<tc>, window_params = [{transform_indices = @transform_0, window_bounds = array<i64: 8, 128>}, {pipeline_mode = #tpu.pipeline_mode<synchronous>, transform_indices = @transform_1, window_bounds = array<i64: 128, 128>}, {transform_indices = @transform_2, window_bounds = array<i64: 8, 128>}, {transform_indices = @transform_3, window_bounds = array<i64: 8, 128>}]} {
    %c0 = arith.constant 0 : index
    %c0_0 = arith.constant 0 : index
    %0 = vector.load %arg1[%c0, %c0_0] : memref<8x128xf32, #tpu.memory_space<vmem>>, vector<8x128xf32>
    %c0_1 = arith.constant 0 : index
    %c0_2 = arith.constant 0 : index
    %1 = vector.load %arg2[%c0_1, %c0_2] : memref<128x128xf32, #tpu.memory_space<vmem>>, vector<128x128xf32>
    %2 = arith.mulf %0, %0 : vector<8x128xf32>
    %cst = arith.constant dense<0.000000e+00> : vector<8xf32>
    %3 = vector.multi_reduction <add>, %2, %cst [1] : vector<8x128xf32> to vector<8xf32>
    %4 = vector.shape_cast %3 : vector<8xf32> to vector<8x1xf32>
    %cst_3 = arith.constant 9.99999993E-9 : f32
    %5 = vector.broadcast %cst_3 : f32 to vector<8x1xf32>
    %6 = arith.maximumf %4, %5 : vector<8x1xf32>
    %7 = math.rsqrt %6 : vector<8x1xf32>
    %8 = vector.broadcast %7 : vector<8x1xf32> to vector<8x128xf32>
    %9 = arith.mulf %0, %8 : vector<8x128xf32>
    %10 = arith.mulf %1, %1 : vector<128x128xf32>
    %cst_4 = arith.constant dense<0.000000e+00> : vector<128xf32>
    %11 = vector.multi_reduction <add>, %10, %cst_4 [0] : vector<128x128xf32> to vector<128xf32>
    %12 = vector.shape_cast %11 : vector<128xf32> to vector<1x128xf32>
    %cst_5 = arith.constant 9.99999993E-9 : f32
    %13 = vector.broadcast %cst_5 : f32 to vector<1x128xf32>
    %14 = arith.maximumf %12, %13 : vector<1x128xf32>
    %15 = math.rsqrt %14 : vector<1x128xf32>
    %16 = vector.broadcast %15 : vector<1x128xf32> to vector<128x128xf32>
    %17 = arith.mulf %1, %16 : vector<128x128xf32>
    %cst_6 = arith.constant dense<0.000000e+00> : vector<8x128xf32>
    %18 = tpu.matmul %9, %17, %cst_6 {dimension_numbers = #tpu.dot_dimension_numbers<[1], [0], [0], [1], [0, 0, 1, 1], [], []>} : vector<8x128xf32>, vector<128x128xf32>, vector<8x128xf32> -> vector<8x128xf32>
    %cst_7 = arith.constant 1.000000e+01 : f32
    %19 = vector.broadcast %cst_7 : f32 to vector<8x128xf32>
    %20 = arith.mulf %18, %19 : vector<8x128xf32>
    %21 = math.exp %20 : vector<8x128xf32>
    %22 = tpu.iota {dimensions = array<i32: 1>} : vector<1x128xi32>
    %c6_i32 = arith.constant 6 : i32
    %23 = vector.broadcast %c6_i32 : i32 to vector<1x128xi32>
    %24 = arith.cmpi slt, %22, %23 : vector<1x128xi32>
    %25 = arith.extui %24 : vector<1x128xi1> to vector<1x128xi32>
    %26 = arith.sitofp %25 : vector<1x128xi32> to vector<1x128xf32>
    %27 = vector.broadcast %26 : vector<1x128xf32> to vector<8x128xf32>
    %28 = arith.mulf %21, %27 : vector<8x128xf32>
    %c0_8 = arith.constant 0 : index
    %c0_9 = arith.constant 0 : index
    %29 = vector.load %arg3[%c0_8, %c0_9] : memref<8x128xf32, #tpu.memory_space<vmem>>, vector<8x128xf32>
    %30 = arith.mulf %28, %29 : vector<8x128xf32>
    %cst_10 = arith.constant dense<0.000000e+00> : vector<8xf32>
    %31 = vector.multi_reduction <add>, %30, %cst_10 [1] : vector<8x128xf32> to vector<8xf32>
    %32 = vector.shape_cast %31 : vector<8xf32> to vector<8x1xf32>
    %cst_11 = arith.constant dense<0.000000e+00> : vector<8xf32>
    %33 = vector.multi_reduction <add>, %28, %cst_11 [1] : vector<8x128xf32> to vector<8xf32>
    %34 = vector.shape_cast %33 : vector<8xf32> to vector<8x1xf32>
    %35 = math.log %34 : vector<8x1xf32>
    %36 = math.log %32 : vector<8x1xf32>
    %37 = arith.subf %35, %36 : vector<8x1xf32>
    %38 = vector.shape_cast %37 : vector<8x1xf32> to vector<8x1xf32>
    %39 = vector.broadcast %38 : vector<8x1xf32> to vector<8x128xf32>
    %c0_12 = arith.constant 0 : index
    %c0_13 = arith.constant 0 : index
    %40 = vector.load %arg4[%c0_12, %c0_13] : memref<8x128xf32, #tpu.memory_space<vmem>>, vector<8x128xf32>
    tpu.vector_store %arg4[%c0_12, %c0_13], %39 {strides = array<i32>} : memref<8x128xf32, #tpu.memory_space<vmem>>, vector<8x128xf32>,
    return
  }
  func.func @transform_0(%arg0: i32) -> (i32, i32) {
    %c0_i32 = arith.constant 0 : i32
    %c0_i32_0 = arith.constant 0 : i32
    return %arg0, %c0_i32 : i32, i32
  }
  func.func @transform_1(%arg0: i32) -> (i32, i32) {
    %c0_i32 = arith.constant 0 : i32
    %c0_i32_0 = arith.constant 0 : i32
    %c0_i32_1 = arith.constant 0 : i32
    return %c0_i32, %c0_i32_0 : i32, i32
  }
  func.func @transform_2(%arg0: i32) -> (i32, i32) {
    %c0_i32 = arith.constant 0 : i32
    %c0_i32_0 = arith.constant 0 : i32
    return %arg0, %c0_i32 : i32, i32
  }
  func.func @transform_3(%arg0: i32) -> (i32, i32) {
    %c0_i32 = arith.constant 0 : i32
    %c0_i32_0 = arith.constant 0 : i32
    return %arg0, %c0_i32 : i32, i32
  }
}

</mosaic_0001>

<llo_original>
// kernel: tpu_custom_call.1
$region0: #{tpu_custom_call.1}
  #allocation0 [shape = 'u32[]', space=smem, size = 0x4, offset = 0x4, fixed_abs, tag = 'smem constant byte address 0x4 - core index']
  #allocation1 [shape = 'u32[72,128]{1,0:T(1,128)}', space=vmem, size = 0x9000, scoped, tag = 'internal scratch']
  %s0 = inlined_call_operand.hbm [shape: f32[8,128], index: 0, kind: input, shape index: {}]
  %s1 = inlined_call_operand.hbm [shape: f32[128,128], index: 1, kind: input, shape index: {}]
  %s2 = inlined_call_operand.hbm [shape: f32[8,128], index: 2, kind: input, shape index: {}]
  %s3 = inlined_call_operand.hbm [shape: f32[8,128], index: 3, kind: output, shape index: {}]
  %s4 = sld [smem:[#allocation0]]
  $region34: #{tpu_custom_call.1} parent=0
    _
  %s6 = ssub.s32 1, %s4
  %s7 = scalar_select 0, %s6, %s4
  $region1: #{tpu_custom_call.1} parent=0
    #allocation2 [shape = 'u8[4096]{0}', space=vmem, size = 0x1000, scoped, tag = 'input window, operand 0, single buffered']
    #allocation3 [shape = 's32[1]{0}', space=sflag, size = 0x4, scoped, tag = 'scoped memory for tpu_custom_call.1']
    #allocation4 [shape = 's32[1]{0}', space=sflag, size = 0x4, scoped, tag = 'scoped memory for tpu_custom_call.1']
    #allocation5 [shape = 'u8[65536]{0}', space=vmem, size = 0x10000, scoped, tag = 'input window, operand 1, single buffered']
    #allocation6 [shape = 's32[1]{0}', space=sflag, size = 0x4, scoped, tag = 'scoped memory for tpu_custom_call.1']
    #allocation7 [shape = 'u8[4096]{0}', space=vmem, size = 0x1000, scoped, tag = 'input window, operand 2, single buffered']
    #allocation8 [shape = 'u8[4096]{0}', space=vmem, size = 0x1000, scoped, tag = 'output window, operand 0, single buffered']
    %8 = vsyncpa [#allocation3], 0
    %9 = vsyncpa [#allocation6], 0
    %10 = vsyncpa [#allocation4], 0
    // Predicated region
    $region2: #{tpu_custom_call.1} parent=1 // pred_check
      _
    $region3: #{tpu_custom_call.1} parent=1 // pred_check_branch
      %12 = sbr.rel (0) target = $region5
    $region4: #{tpu_custom_call.1} parent=1 // pred_region
      %14 = vsyncadd [#allocation3], 0
      %s16 = sshll.u32 %s0, 4
      %s17 = int_to_ptr.hbm [resolvable:$true] %s16
      %s18 = sshll.u32 [#allocation2], 4
      %s19 = int_to_ptr.vmem [resolvable:$true] %s18
      %21 = dma.hbm_to_vmem [thread:$0]  %s17, 128, %s19, [#allocation3]
    $region5: #{tpu_custom_call.1} parent=1 // pred_fallthru
      _
    // Predicated region
    $region6: #{tpu_custom_call.1} parent=1 // pred_check
      _
    $region7: #{tpu_custom_call.1} parent=1 // pred_check_branch
      %23 = sbr.rel (0) target = $region9
    $region8: #{tpu_custom_call.1} parent=1 // pred_region
      %25 = vsyncadd [#allocation6], 0
      %s26 = sshll.u32 %s1, 4
      %s27 = int_to_ptr.hbm [resolvable:$true] %s26
      %s28 = sshll.u32 [#allocation5], 4
      %s29 = int_to_ptr.vmem [resolvable:$true] %s28
      %34 = dma.hbm_to_vmem [thread:$0]  %s27, 2048, %s29, [#allocation6], 128, 128, 8
    $region9: #{tpu_custom_call.1} parent=1 // pred_fallthru
      _
    // Predicated region
    $region10: #{tpu_custom_call.1} parent=1 // pred_check
      _
    $region11: #{tpu_custom_call.1} parent=1 // pred_check_branch
      %36 = sbr.rel (0) target = $region13
    $region12: #{tpu_custom_call.1} parent=1 // pred_region
      %38 = vsyncadd [#allocation6], 0
      %s40 = sshll.u32 %s2, 4
      %s41 = int_to_ptr.hbm [resolvable:$true] %s40
      %s42 = sshll.u32 [#allocation7], 4
      %s43 = int_to_ptr.vmem [resolvable:$true] %s42
      %45 = dma.hbm_to_vmem [thread:$0]  %s41, 128, %s43, [#allocation6]
    $region13: #{tpu_custom_call.1} parent=1 // pred_fallthru
      _
    // Predicated region
    $region14: #{tpu_custom_call.1} parent=1 // pred_check
      _
    $region15: #{tpu_custom_call.1} parent=1 // pred_check_branch
      %47 = sbr.rel (0) target = $region17
    $region16: #{tpu_custom_call.1} parent=1 // pred_region
      %49 = dma.done [#allocation3], 128
    $region17: #{tpu_custom_call.1} parent=1 // pred_fallthru
      _
    // Predicated region
    $region18: #{tpu_custom_call.1} parent=1 // pred_check
      _
    $region19: #{tpu_custom_call.1} parent=1 // pred_check_branch
      %51 = sbr.rel (0) target = $region21
    $region20: #{tpu_custom_call.1} parent=1 // pred_region
      %53 = dma.done [#allocation6], 2048
    $region21: #{tpu_custom_call.1} parent=1 // pred_fallthru
      _
    // Predicated region
    $region22: #{tpu_custom_call.1} parent=1 // pred_check
      _
    $region23: #{tpu_custom_call.1} parent=1 // pred_check_branch
      %55 = sbr.rel (0) target = $region25
    $region24: #{tpu_custom_call.1} parent=1 // pred_region
      %57 = dma.done [#allocation6], 128
    $region25: #{tpu_custom_call.1} parent=1 // pred_fallthru
      _
    %v58 = vld [vmem:[#allocation2] sm:$0xff]
    %v59 = vld [vmem:[#allocation5] sm:$0xff]
    %v60 = vld [vmem:[#allocation5 + $0x8] sm:$0xff]
    %v61 = vld [vmem:[#allocation5 + $0x10] sm:$0xff]
    %v62 = vld [vmem:[#allocation5 + $0x18] sm:$0xff]
    %v63 = vld [vmem:[#allocation5 + $0x20] sm:$0xff]
    %v64 = vld [vmem:[#allocation5 + $0x28] sm:$0xff]
    %v65 = vld [vmem:[#allocation5 + $0x30] sm:$0xff]
    %v66 = vld [vmem:[#allocation5 + $0x38] sm:$0xff]
    %v67 = vld [vmem:[#allocation5 + $0x40] sm:$0xff]
    %v68 = vld [vmem:[#allocation5 + $0x48] sm:$0xff]
    %v69 = vld [vmem:[#allocation5 + $0x50] sm:$0xff]
    %v70 = vld [vmem:[#allocation5 + $0x58] sm:$0xff]
    %v71 = vld [vmem:[#allocation5 + $0x60] sm:$0xff]
    %v72 = vld [vmem:[#allocation5 + $0x68] sm:$0xff]
    %v73 = vld [vmem:[#allocation5 + $0x70] sm:$0xff]
    %v74 = vld [vmem:[#allocation5 + $0x78] sm:$0xff]
    %v75 = vmul.f32 %v58, %v58
    %76 = vadd.xlane.f32.xlu0 %v75
    %v77 = vpop.xlane.xlu0 %76
    %v78 = vmax.f32 %v77, 1e-08
    %v79 = vrsqrt.pop %v78
    %v80 = vmul.f32 %v79, %v78
    %v81 = vmul.f32 %v80, %v79
    %v82 = vmul.f32 0.5, %v81
    %v83 = vsub.f32 1.5, %v82
    %v84 = vmul.f32 %v79, %v83
    %vm85 = vweird.f32 %v78
    %vm86 = vweird.f32 %v79
    %vm87 = vmor %vm85, %vm86
    %v88 = vsel %vm87, %v79, %v84
    %v89 = vmul.f32 %v58, %v88
    %v90 = vmul.f32 %v59, %v59
    %v91 = vmul.f32 %v60, %v60
    %v92 = vmul.f32 %v61, %v61
    %v93 = vmul.f32 %v62, %v62
    %v94 = vmul.f32 %v63, %v63
    %v95 = vmul.f32 %v64, %v64
    %v96 = vmul.f32 %v65, %v65
    %v97 = vmul.f32 %v66, %v66
    %v98 = vmul.f32 %v67, %v67
    %v99 = vmul.f32 %v68, %v68
    %v100 = vmul.f32 %v69, %v69
    %v101 = vmul.f32 %v70, %v70
    %v102 = vmul.f32 %v71, %v71
    %v103 = vmul.f32 %v72, %v72
    %v104 = vmul.f32 %v73, %v73
    %v105 = vmul.f32 %v74, %v74
    %v106 = vadd.f32 %v90, %v91
    %v107 = vadd.f32 %v106, %v92
    %v108 = vadd.f32 %v107, %v93
    %v109 = vadd.f32 %v108, %v94
    %v110 = vadd.f32 %v109, %v95
    %v111 = vadd.f32 %v110, %v96
    %v112 = vadd.f32 %v111, %v97
    %v113 = vadd.f32 %v112, %v98
    %v114 = vadd.f32 %v113, %v99
    %v115 = vadd.f32 %v114, %v100
    %v116 = vadd.f32 %v115, %v101
    %v117 = vadd.f32 %v116, %v102
    %v118 = vadd.f32 %v117, %v103
    %v119 = vadd.f32 %v118, %v104
    %v120 = vadd.f32 %v119, %v105
    %v121 = vrot.slane %v120, 4
    %v122 = vadd.f32 %v120, %v121
    %v123 = vrot.slane %v122, 2
    %v124 = vadd.f32 %v122, %v123
    %v125 = vrot.slane %v124, 1
    %v126 = vadd.f32 %v124, %v125
    %v127 = vmax.f32 %v126, 1e-08
    %v128 = vrsqrt.pop %v127
    %v129 = vmul.f32 %v128, %v127
    %v130 = vmul.f32 %v129, %v128
    %v131 = vmul.f32 0.5, %v130
    %v132 = vsub.f32 1.5, %v131
    %v133 = vmul.f32 %v128, %v132
    %vm134 = vweird.f32 %v127
    %vm135 = vweird.f32 %v128
    %vm136 = vmor %vm134, %vm135
    %v137 = vsel %vm136, %v128, %v133
    %v138 = vmul.f32 %v59, %v137
    %v139 = vmul.f32 %v60, %v137
    %v140 = vmul.f32 %v61, %v137
    %v141 = vmul.f32 %v62, %v137
    %v142 = vmul.f32 %v63, %v137
    %v143 = vmul.f32 %v64, %v137
    %v144 = vmul.f32 %v65, %v137
    %v145 = vmul.f32 %v66, %v137
    %v146 = vmul.f32 %v67, %v137
    %v147 = vmul.f32 %v68, %v137
    %v148 = vmul.f32 %v69, %v137
    %v149 = vmul.f32 %v70, %v137
    %v150 = vmul.f32 %v71, %v137
    %v151 = vmul.f32 %v72, %v137
    %v152 = vmul.f32 %v73, %v137
    %v153 = vmul.f32 %v74, %v137
    %154 = vmatpush.msra.mxu0 %v153
    %155 = vmatpush.msra.mxu0 %v152
    %156 = vmatpush.msra.mxu0 %v151
    %157 = vmatpush.msra.mxu0 %v150
    %158 = vmatpush.msra.mxu0 %v149
    %159 = vmatpush.msra.mxu0 %v148
    %160 = vmatpush.msra.mxu0 %v147
    %161 = vmatpush.msra.mxu0 %v146
    %162 = vmatpush.msra.mxu0 %v145
    %163 = vmatpush.msra.mxu0 %v144
    %164 = vmatpush.msra.mxu0 %v143
    %165 = vmatpush.msra.mxu0 %v142
    %166 = vmatpush.msra.mxu0 %v141
    %167 = vmatpush.msra.mxu0 %v140
    %168 = vmatpush.msra.mxu0 %v139
    %169 = vmatpush.msra.mxu0 %v138
    %170 = vmatmul.f32.gmra.mxu0 %v89
    %v171 = vpop.f32.mrf.mxu0
    %v172 = vadd.f32 0.0, %v171
    %173 = vdwg.mxu0
    %v174 = vmul.f32 %v172, 10.0
    %v175 = vmul.f32 %v174, 1.442695
    %v176 = vpow.pop %v175
    %v177 = vlaneseq
    %v178 = vand.u32 %v177, 127
    %vm179 = vcmp.lt.s32.totalorder %v178, 6
    %v180 = vsel %vm179, 1, 0
    %v181 = vcvt.s32.f32 %v180
    %v182 = vmul.f32 %v176, %v181
    %v183 = vld [vmem:[#allocation7] sm:$0xff]
    %v184 = vmul.f32 %v182, %v183
    %185 = vadd.xlane.f32.xlu0 %v184
    %v186 = vpop.xlane.xlu0 %185
    %187 = vadd.xlane.f32.xlu0 %v182
    %v188 = vpop.xlane.xlu0 %187
    %v189 = vlog2.pop %v188
    %v190 = vmul.f32 %v189, 0.6931472
    %v191 = vlog2.pop %v186
    %v192 = vmul.f32 %v191, 0.6931472
    %v193 = vsub.f32 %v190, %v192
    %194 = vst [vmem:[#allocation8] sm:$0xff] %v193
    // Predicated region
    $region26: #{tpu_custom_call.1} parent=1 // pred_check
      _
    $region27: #{tpu_custom_call.1} parent=1 // pred_check_branch
      %196 = sbr.rel (0) target = $region29
    $region28: #{tpu_custom_call.1} parent=1 // pred_region
      %198 = vsyncadd [#allocation4], 0
      %s200 = sshll.u32 [#allocation8], 4
      %s201 = int_to_ptr.vmem [resolvable:$true] %s200
      %s202 = sshll.u32 %s3, 4
      %s203 = int_to_ptr.hbm [resolvable:$true] %s202
      %205 = dma.vmem_to_hbm [thread:$0]  %s201, 128, %s203, [#allocation4]
    $region29: #{tpu_custom_call.1} parent=1 // pred_fallthru
      _
    // Predicated region
    $region30: #{tpu_custom_call.1} parent=1 // pred_check
      _
    $region31: #{tpu_custom_call.1} parent=1 // pred_check_branch
      %207 = sbr.rel (0) target = $region33
    $region32: #{tpu_custom_call.1} parent=1 // pred_region
      %209 = dma.done [#allocation4], 128
    $region33: #{tpu_custom_call.1} parent=1 // pred_fallthru
      _
    %210 = vsyncpa [#allocation3], 1
    %211 = vsyncpa [#allocation6], 1
    %212 = vsyncpa [#allocation4], 1

</llo_original>
